<compile_context>
chip_gen: v7x
topology: tpu7x:2x2x1
jax: 0.10.0
libtpu: 0.0.40
codegen_flags: <defaults>
</compile_context>

<pallas_src>
import functools

import jax
import jax.numpy as jnp
import numpy as np
from jax.experimental import pallas as pl
from jax.experimental.pallas import tpu as pltpu

_EPS = 1e-5
_SLOPE = 0.2  # LeakyReLU negative slope


def _round_up(x, m):
    return (x + m - 1) // m * m


# -------------------- Pallas kernel --------------------

def _dance2style_kernel(x_ref, w1_ref, w2_ref, w3_ref, w4_ref, p_ref, out_ref):
    """Fused 4-layer MLP: (Linear -> LayerNorm -> LeakyReLU) x3 -> Linear.

    p_ref is a packed (10, Pmax) slab:
      rows 3*i .. 3*i+2 : [bias_i, gamma_i, beta_i] for LN layers i = 0..2
      row  9            : final bias (layer 4)
    Each row is zero-padded to Pmax lanes; valid widths are static (from the
    weight ref shapes), so all slicing below is static value slicing.
    """
    p = p_ref[...]                                             # (10, Pmax)

    def ln_lrelu(h, row):
        n = h.shape[-1]
        bias = p[row:row + 1, :n]
        gamma = p[row + 1:row + 2, :n]
        beta = p[row + 2:row + 3, :n]
        h = h + bias
        # Single-pass LayerNorm: mean and mean-of-squares are independent
        # reductions (no mu -> var serial dependency on the XLU).
        mu = jnp.mean(h, axis=-1, keepdims=True)
        ms = jnp.mean(h * h, axis=-1, keepdims=True)
        var = ms - mu * mu
        h = (h - mu) * jax.lax.rsqrt(var + _EPS) * gamma + beta
        # LeakyReLU(0.2): max(h, 0.2*h) is exact for slope in (0, 1).
        return jnp.maximum(h, _SLOPE * h)

    x = x_ref[...]                                             # (tb, D)
    h = ln_lrelu(
        jnp.dot(x, w1_ref[...], preferred_element_type=jnp.float32), 0)
    h = ln_lrelu(
        jnp.dot(h, w2_ref[...], preferred_element_type=jnp.float32), 3)
    h = ln_lrelu(
        jnp.dot(h, w3_ref[...], preferred_element_type=jnp.float32), 6)
    aud = w4_ref.shape[1]
    out_ref[...] = (
        jnp.dot(h, w4_ref[...], preferred_element_type=jnp.float32)
        + p[9:10, :aud])


# -------------------- parameter setup (deterministic, torch-like init) ------

def init_raw_params(key, dim_z_dance, aud_size, nd=512):
    """Raw params in PyTorch layout: Linear.weight is (out, in)."""
    dims = [(dim_z_dance, nd), (nd, nd // 2), (nd // 2, nd // 4),
            (nd // 4, aud_size)]
    ks = iter(jax.random.split(key, 2 * len(dims)))

    def u(shape, fan_in):
        k = 1.0 / np.sqrt(fan_in)
        return jax.random.uniform(next(ks), shape, jnp.float32, -k, k)

    raw = {"layers": []}
    for i, (din, dout) in enumerate(dims):
        layer = {"W": u((dout, din), din), "b": u((dout,), din)}
        if i < len(dims) - 1:  # LayerNorm after first three linears
            layer["gamma"] = jnp.ones((dout,), jnp.float32)
            layer["beta"] = jnp.zeros((dout,), jnp.float32)
        raw["layers"].append(layer)
    return raw


def pack_params(raw):
    """One-time host-side packing:
      * transpose weights to (in, out) so the kernel does plain x @ W,
      * pack all bias/gamma/beta vectors + final bias into one (10, Pmax) slab.
    """
    L = raw["layers"]
    packed = {
        "w1": L[0]["W"].T, "w2": L[1]["W"].T,
        "w3": L[2]["W"].T, "w4": L[3]["W"].T,
    }
    pmax = max(l["W"].shape[0] for l in L)          # widest layer output (512)
    rows = []
    for i in range(3):
        for name in ("b", "gamma", "beta"):
            v = L[i][name]
            rows.append(jnp.pad(v, (0, pmax - v.shape[0])))
    b4 = L[3]["b"]
    rows.append(jnp.pad(b4, (0, pmax - b4.shape[0])))
    packed["params"] = jnp.stack(rows, axis=0)      # (10, pmax) f32
    return packed


# -------------------- wrapper (forward) --------------------

def dance2style_forward(zdance, packed, *, block_b=256):
    B, D = zdance.shape
    aud = packed["w4"].shape[1]

    # Batch tile: multiple of 8 (sublane), capped at block_b; pad batch to it.
    tb = min(_round_up(block_b, 8), _round_up(B, 8))
    b_pad = _round_up(B, tb)
    if b_pad != B:
        zdance = jnp.pad(zdance, ((0, b_pad - B), (0, 0)))
    grid = (b_pad // tb,)

    flops = 2 * b_pad * sum(
        packed[k].shape[0] * packed[k].shape[1]
        for k in ("w1", "w2", "w3", "w4"))
    bytes_accessed = 4 * (b_pad * D + b_pad * aud + sum(
        int(np.prod(packed[k].shape))
        for k in ("w1", "w2", "w3", "w4", "params")))

    out = pl.pallas_call(
        _dance2style_kernel,
        out_shape=jax.ShapeDtypeStruct((b_pad, aud), jnp.float32),
        grid=grid,
        in_specs=[
            # activations: tiled over the (parallel) batch grid axis
            pl.BlockSpec((tb, D), lambda i: (i, 0)),
            # weights + packed params: constant block index -> fetched once,
            # stay VMEM-resident across every grid step
            pl.BlockSpec(packed["w1"].shape, lambda i: (0, 0)),
            pl.BlockSpec(packed["w2"].shape, lambda i: (0, 0)),
            pl.BlockSpec(packed["w3"].shape, lambda i: (0, 0)),
            pl.BlockSpec(packed["w4"].shape, lambda i: (0, 0)),
            pl.BlockSpec(packed["params"].shape, lambda i: (0, 0)),
        ],
        out_specs=pl.BlockSpec((tb, aud), lambda i: (i, 0)),
        compiler_params=pltpu.CompilerParams(
            dimension_semantics=("parallel",)),
        cost_estimate=pl.CostEstimate(
            flops=int(flops),
            bytes_accessed=int(bytes_accessed),
            transcendentals=int(3 * b_pad)),
    )(zdance, packed["w1"], packed["w2"], packed["w3"], packed["w4"],
      packed["params"])
    return out[:B]


# -------------------- pure-JAX reference (torch semantics) --------------------

def dance2style_reference(zdance, raw):
    hp = jax.lax.Precision.HIGHEST
    h = zdance
    for i, layer in enumerate(raw["layers"]):
        h = jnp.dot(h, layer["W"].T, precision=hp) + layer["b"]
        if i < 3:
            mu = h.mean(-1, keepdims=True)
            var = ((h - mu) ** 2).mean(-1, keepdims=True)
            h = (h - mu) / jnp.sqrt(var + _EPS) * layer["gamma"] + layer["beta"]
            h = jnp.where(h >= 0, h, _SLOPE * h)
    return h


# -------------------- main --------------------

if __name__ == "__main__":
    DIM_Z_DANCE, AUD_SIZE = 16, 32   # small shapes consistent with the module

    key = jax.random.PRNGKey(0)
    kp, kz1, kz2 = jax.random.split(key, 3)
    raw = init_raw_params(kp, DIM_Z_DANCE, AUD_SIZE)
    packed = pack_params(raw)        # one-time host-side packing

    fwd_small = jax.jit(dance2style_forward)
    fwd_tiled = jax.jit(functools.partial(dance2style_forward, block_b=32))

    # Case 1: tiny batch (B=2) — pads to one 8-row tile, grid=(1,).
    z2 = jax.random.normal(kz1, (2, DIM_Z_DANCE), jnp.float32)
    out2 = fwd_small(z2, packed)
    jax.block_until_ready(out2)
    ref2 = dance2style_reference(z2, raw)
    assert out2.shape == (2, AUD_SIZE)
    np.testing.assert_allclose(np.asarray(out2), np.asarray(ref2),
                               atol=2e-3, rtol=2e-3)

    # Case 2: batched path — exercises the multi-step parallel batch grid with
    # weights kept VMEM-resident across grid steps.
    z64 = jax.random.normal(kz2, (64, DIM_Z_DANCE), jnp.float32)
    out64 = fwd_tiled(z64, packed)
    jax.block_until_ready(out64)
    ref64 = dance2style_reference(z64, raw)
    assert out64.shape == (64, AUD_SIZE)
    np.testing.assert_allclose(np.asarray(out64), np.asarray(ref64),
                               atol=2e-3, rtol=2e-3)

    print("KERNEL_OK")
</pallas_src>

<mosaic_0001>
module attributes {stable_mosaic.version = 11 : i64} {
  func.func @_dance2style_kernel(%arg0: i32, %arg1: memref<8x16xf32, #tpu.memory_space<vmem>>, %arg2: memref<16x512xf32, #tpu.memory_space<vmem>>, %arg3: memref<512x256xf32, #tpu.memory_space<vmem>>, %arg4: memref<256x128xf32, #tpu.memory_space<vmem>>, %arg5: memref<128x32xf32, #tpu.memory_space<vmem>>, %arg6: memref<10x512xf32, #tpu.memory_space<vmem>>, %arg7: memref<8x32xf32, #tpu.memory_space<vmem>>) attributes {dimension_semantics = [#tpu.dimension_semantics<parallel>], iteration_bounds = array<i64: 1>, scalar_prefetch = 0 : i64, scratch_operands = 0 : i64, tpu.core_type = #tpu.core_type<tc>, window_params = [{transform_indices = @transform_0, window_bounds = array<i64: 8, 16>}, {pipeline_mode = #tpu.pipeline_mode<synchronous>, transform_indices = @transform_1, window_bounds = array<i64: 16, 512>}, {pipeline_mode = #tpu.pipeline_mode<synchronous>, transform_indices = @transform_2, window_bounds = array<i64: 512, 256>}, {pipeline_mode = #tpu.pipeline_mode<synchronous>, transform_indices = @transform_3, window_bounds = array<i64: 256, 128>}, {pipeline_mode = #tpu.pipeline_mode<synchronous>, transform_indices = @transform_4, window_bounds = array<i64: 128, 32>}, {pipeline_mode = #tpu.pipeline_mode<synchronous>, transform_indices = @transform_5, window_bounds = array<i64: 10, 512>}, {transform_indices = @transform_6, window_bounds = array<i64: 8, 32>}]} {
    %c0 = arith.constant 0 : index
    %c0_0 = arith.constant 0 : index
    %0 = vector.load %arg6[%c0, %c0_0] : memref<10x512xf32, #tpu.memory_space<vmem>>, vector<10x512xf32>
    %c0_1 = arith.constant 0 : index
    %c0_2 = arith.constant 0 : index
    %1 = vector.load %arg1[%c0_1, %c0_2] : memref<8x16xf32, #tpu.memory_space<vmem>>, vector<8x16xf32>
    %c0_3 = arith.constant 0 : index
    %c0_4 = arith.constant 0 : index
    %2 = vector.load %arg2[%c0_3, %c0_4] : memref<16x512xf32, #tpu.memory_space<vmem>>, vector<16x512xf32>
    %cst = arith.constant dense<0.000000e+00> : vector<8x512xf32>
    %3 = tpu.matmul %1, %2, %cst {dimension_numbers = #tpu.dot_dimension_numbers<[1], [0], [0], [1], [0, 0, 1, 1], [], []>} : vector<8x16xf32>, vector<16x512xf32>, vector<8x512xf32> -> vector<8x512xf32>
    %4 = vector.extract_strided_slice %0 {offsets = [0, 0], sizes = [1, 512], strides = [1, 1]} : vector<10x512xf32> to vector<1x512xf32>
    %5 = vector.extract_strided_slice %0 {offsets = [1, 0], sizes = [1, 512], strides = [1, 1]} : vector<10x512xf32> to vector<1x512xf32>
    %6 = vector.extract_strided_slice %0 {offsets = [2, 0], sizes = [1, 512], strides = [1, 1]} : vector<10x512xf32> to vector<1x512xf32>
    %7 = vector.broadcast %4 : vector<1x512xf32> to vector<8x512xf32>
    %8 = arith.addf %3, %7 : vector<8x512xf32>
    %cst_5 = arith.constant dense<0.000000e+00> : vector<8xf32>
    %9 = vector.multi_reduction <add>, %8, %cst_5 [1] : vector<8x512xf32> to vector<8xf32>
    %10 = vector.shape_cast %9 : vector<8xf32> to vector<8x1xf32>
    %cst_6 = arith.constant 5.120000e+02 : f32
    %11 = vector.broadcast %cst_6 : f32 to vector<8x1xf32>
    %12 = arith.divf %10, %11 : vector<8x1xf32>
    %13 = arith.mulf %8, %8 : vector<8x512xf32>
    %cst_7 = arith.constant dense<0.000000e+00> : vector<8xf32>
    %14 = vector.multi_reduction <add>, %13, %cst_7 [1] : vector<8x512xf32> to vector<8xf32>
    %15 = vector.shape_cast %14 : vector<8xf32> to vector<8x1xf32>
    %cst_8 = arith.constant 5.120000e+02 : f32
    %16 = vector.broadcast %cst_8 : f32 to vector<8x1xf32>
    %17 = arith.divf %15, %16 : vector<8x1xf32>
    %18 = arith.mulf %12, %12 : vector<8x1xf32>
    %19 = arith.subf %17, %18 : vector<8x1xf32>
    %20 = vector.broadcast %12 : vector<8x1xf32> to vector<8x512xf32>
    %21 = arith.subf %8, %20 : vector<8x512xf32>
    %cst_9 = arith.constant 9.99999974E-6 : f32
    %22 = vector.broadcast %cst_9 : f32 to vector<8x1xf32>
    %23 = arith.addf %19, %22 : vector<8x1xf32>
    %24 = math.rsqrt %23 : vector<8x1xf32>
    %25 = vector.broadcast %24 : vector<8x1xf32> to vector<8x512xf32>
    %26 = arith.mulf %21, %25 : vector<8x512xf32>
    %27 = vector.broadcast %5 : vector<1x512xf32> to vector<8x512xf32>
    %28 = arith.mulf %26, %27 : vector<8x512xf32>
    %29 = vector.broadcast %6 : vector<1x512xf32> to vector<8x512xf32>
    %30 = arith.addf %28, %29 : vector<8x512xf32>
    %cst_10 = arith.constant 2.000000e-01 : f32
    %31 = vector.broadcast %cst_10 : f32 to vector<8x512xf32>
    %32 = arith.mulf %31, %30 : vector<8x512xf32>
    %33 = arith.maximumf %30, %32 : vector<8x512xf32>
    %c0_11 = arith.constant 0 : index
    %c0_12 = arith.constant 0 : index
    %34 = vector.load %arg3[%c0_11, %c0_12] : memref<512x256xf32, #tpu.memory_space<vmem>>, vector<512x256xf32>
    %cst_13 = arith.constant dense<0.000000e+00> : vector<8x256xf32>
    %35 = tpu.matmul %33, %34, %cst_13 {dimension_numbers = #tpu.dot_dimension_numbers<[1], [0], [0], [1], [0, 0, 1, 1], [], []>} : vector<8x512xf32>, vector<512x256xf32>, vector<8x256xf32> -> vector<8x256xf32>
    %36 = vector.extract_strided_slice %0 {offsets = [3, 0], sizes = [1, 256], strides = [1, 1]} : vector<10x512xf32> to vector<1x256xf32>
    %37 = vector.extract_strided_slice %0 {offsets = [4, 0], sizes = [1, 256], strides = [1, 1]} : vector<10x512xf32> to vector<1x256xf32>
    %38 = vector.extract_strided_slice %0 {offsets = [5, 0], sizes = [1, 256], strides = [1, 1]} : vector<10x512xf32> to vector<1x256xf32>
    %39 = vector.broadcast %36 : vector<1x256xf32> to vector<8x256xf32>
    %40 = arith.addf %35, %39 : vector<8x256xf32>
    %cst_14 = arith.constant dense<0.000000e+00> : vector<8xf32>
    %41 = vector.multi_reduction <add>, %40, %cst_14 [1] : vector<8x256xf32> to vector<8xf32>
    %42 = vector.shape_cast %41 : vector<8xf32> to vector<8x1xf32>
    %cst_15 = arith.constant 2.560000e+02 : f32
    %43 = vector.broadcast %cst_15 : f32 to vector<8x1xf32>
    %44 = arith.divf %42, %43 : vector<8x1xf32>
    %45 = arith.mulf %40, %40 : vector<8x256xf32>
    %cst_16 = arith.constant dense<0.000000e+00> : vector<8xf32>
    %46 = vector.multi_reduction <add>, %45, %cst_16 [1] : vector<8x256xf32> to vector<8xf32>
    %47 = vector.shape_cast %46 : vector<8xf32> to vector<8x1xf32>
    %cst_17 = arith.constant 2.560000e+02 : f32
    %48 = vector.broadcast %cst_17 : f32 to vector<8x1xf32>
    %49 = arith.divf %47, %48 : vector<8x1xf32>
    %50 = arith.mulf %44, %44 : vector<8x1xf32>
    %51 = arith.subf %49, %50 : vector<8x1xf32>
    %52 = vector.broadcast %44 : vector<8x1xf32> to vector<8x256xf32>
    %53 = arith.subf %40, %52 : vector<8x256xf32>
    %cst_18 = arith.constant 9.99999974E-6 : f32
    %54 = vector.broadcast %cst_18 : f32 to vector<8x1xf32>
    %55 = arith.addf %51, %54 : vector<8x1xf32>
    %56 = math.rsqrt %55 : vector<8x1xf32>
    %57 = vector.broadcast %56 : vector<8x1xf32> to vector<8x256xf32>
    %58 = arith.mulf %53, %57 : vector<8x256xf32>
    %59 = vector.broadcast %37 : vector<1x256xf32> to vector<8x256xf32>
    %60 = arith.mulf %58, %59 : vector<8x256xf32>
    %61 = vector.broadcast %38 : vector<1x256xf32> to vector<8x256xf32>
    %62 = arith.addf %60, %61 : vector<8x256xf32>
    %cst_19 = arith.constant 2.000000e-01 : f32
    %63 = vector.broadcast %cst_19 : f32 to vector<8x256xf32>
    %64 = arith.mulf %63, %62 : vector<8x256xf32>
    %65 = arith.maximumf %62, %64 : vector<8x256xf32>
    %c0_20 = arith.constant 0 : index
    %c0_21 = arith.constant 0 : index
    %66 = vector.load %arg4[%c0_20, %c0_21] : memref<256x128xf32, #tpu.memory_space<vmem>>, vector<256x128xf32>
    %cst_22 = arith.constant dense<0.000000e+00> : vector<8x128xf32>
    %67 = tpu.matmul %65, %66, %cst_22 {dimension_numbers = #tpu.dot_dimension_numbers<[1], [0], [0], [1], [0, 0, 1, 1], [], []>} : vector<8x256xf32>, vector<256x128xf32>, vector<8x128xf32> -> vector<8x128xf32>
    %68 = vector.extract_strided_slice %0 {offsets = [6, 0], sizes = [1, 128], strides = [1, 1]} : vector<10x512xf32> to vector<1x128xf32>
    %69 = vector.extract_strided_slice %0 {offsets = [7, 0], sizes = [1, 128], strides = [1, 1]} : vector<10x512xf32> to vector<1x128xf32>
    %70 = vector.extract_strided_slice %0 {offsets = [8, 0], sizes = [1, 128], strides = [1, 1]} : vector<10x512xf32> to vector<1x128xf32>
    %71 = vector.broadcast %68 : vector<1x128xf32> to vector<8x128xf32>
    %72 = arith.addf %67, %71 : vector<8x128xf32>
    %cst_23 = arith.constant dense<0.000000e+00> : vector<8xf32>
    %73 = vector.multi_reduction <add>, %72, %cst_23 [1] : vector<8x128xf32> to vector<8xf32>
    %74 = vector.shape_cast %73 : vector<8xf32> to vector<8x1xf32>
    %cst_24 = arith.constant 1.280000e+02 : f32
    %75 = vector.broadcast %cst_24 : f32 to vector<8x1xf32>
    %76 = arith.divf %74, %75 : vector<8x1xf32>
    %77 = arith.mulf %72, %72 : vector<8x128xf32>
    %cst_25 = arith.constant dense<0.000000e+00> : vector<8xf32>
    %78 = vector.multi_reduction <add>, %77, %cst_25 [1] : vector<8x128xf32> to vector<8xf32>
    %79 = vector.shape_cast %78 : vector<8xf32> to vector<8x1xf32>
    %cst_26 = arith.constant 1.280000e+02 : f32
    %80 = vector.broadcast %cst_26 : f32 to vector<8x1xf32>
    %81 = arith.divf %79, %80 : vector<8x1xf32>
    %82 = arith.mulf %76, %76 : vector<8x1xf32>
    %83 = arith.subf %81, %82 : vector<8x1xf32>
    %84 = vector.broadcast %76 : vector<8x1xf32> to vector<8x128xf32>
    %85 = arith.subf %72, %84 : vector<8x128xf32>
    %cst_27 = arith.constant 9.99999974E-6 : f32
    %86 = vector.broadcast %cst_27 : f32 to vector<8x1xf32>
    %87 = arith.addf %83, %86 : vector<8x1xf32>
    %88 = math.rsqrt %87 : vector<8x1xf32>
    %89 = vector.broadcast %88 : vector<8x1xf32> to vector<8x128xf32>
    %90 = arith.mulf %85, %89 : vector<8x128xf32>
    %91 = vector.broadcast %69 : vector<1x128xf32> to vector<8x128xf32>
    %92 = arith.mulf %90, %91 : vector<8x128xf32>
    %93 = vector.broadcast %70 : vector<1x128xf32> to vector<8x128xf32>
    %94 = arith.addf %92, %93 : vector<8x128xf32>
    %cst_28 = arith.constant 2.000000e-01 : f32
    %95 = vector.broadcast %cst_28 : f32 to vector<8x128xf32>
    %96 = arith.mulf %95, %94 : vector<8x128xf32>
    %97 = arith.maximumf %94, %96 : vector<8x128xf32>
    %c0_29 = arith.constant 0 : index
    %c0_30 = arith.constant 0 : index
    %98 = vector.load %arg5[%c0_29, %c0_30] : memref<128x32xf32, #tpu.memory_space<vmem>>, vector<128x32xf32>
    %cst_31 = arith.constant dense<0.000000e+00> : vector<8x32xf32>
    %99 = tpu.matmul %97, %98, %cst_31 {dimension_numbers = #tpu.dot_dimension_numbers<[1], [0], [0], [1], [0, 0, 1, 1], [], []>} : vector<8x128xf32>, vector<128x32xf32>, vector<8x32xf32> -> vector<8x32xf32>
    %100 = vector.extract_strided_slice %0 {offsets = [9, 0], sizes = [1, 32], strides = [1, 1]} : vector<10x512xf32> to vector<1x32xf32>
    %101 = vector.broadcast %100 : vector<1x32xf32> to vector<8x32xf32>
    %102 = arith.addf %99, %101 : vector<8x32xf32>
    %c0_32 = arith.constant 0 : index
    %c0_33 = arith.constant 0 : index
    %103 = vector.load %arg7[%c0_32, %c0_33] : memref<8x32xf32, #tpu.memory_space<vmem>>, vector<8x32xf32>
    tpu.vector_store %arg7[%c0_32, %c0_33], %102 {strides = array<i32>} : memref<8x32xf32, #tpu.memory_space<vmem>>, vector<8x32xf32>,
    return
  }
  func.func @transform_0(%arg0: i32) -> (i32, i32) {
    %c0_i32 = arith.constant 0 : i32
    %c0_i32_0 = arith.constant 0 : i32
    return %arg0, %c0_i32 : i32, i32
  }
  func.func @transform_1(%arg0: i32) -> (i32, i32) {
    %c0_i32 = arith.constant 0 : i32
    %c0_i32_0 = arith.constant 0 : i32
    %c0_i32_1 = arith.constant 0 : i32
    return %c0_i32, %c0_i32_0 : i32, i32
  }
  func.func @transform_2(%arg0: i32) -> (i32, i32) {
    %c0_i32 = arith.constant 0 : i32
    %c0_i32_0 = arith.constant 0 : i32
    %c0_i32_1 = arith.constant 0 : i32
    return %c0_i32, %c0_i32_0 : i32, i32
  }
  func.func @transform_3(%arg0: i32) -> (i32, i32) {
    %c0_i32 = arith.constant 0 : i32
    %c0_i32_0 = arith.constant 0 : i32
    %c0_i32_1 = arith.constant 0 : i32
    return %c0_i32, %c0_i32_0 : i32, i32
  }
  func.func @transform_4(%arg0: i32) -> (i32, i32) {
    %c0_i32 = arith.constant 0 : i32
    %c0_i32_0 = arith.constant 0 : i32
    %c0_i32_1 = arith.constant 0 : i32
    return %c0_i32, %c0_i32_0 : i32, i32
  }
  func.func @transform_5(%arg0: i32) -> (i32, i32) {
    %c0_i32 = arith.constant 0 : i32
    %c0_i32_0 = arith.constant 0 : i32
    %c0_i32_1 = arith.constant 0 : i32
    return %c0_i32, %c0_i32_0 : i32, i32
  }
  func.func @transform_6(%arg0: i32) -> (i32, i32) {
    %c0_i32 = arith.constant 0 : i32
    %c0_i32_0 = arith.constant 0 : i32
    return %arg0, %c0_i32 : i32, i32
  }
}

</mosaic_0001>

<llo_original>
// kernel: dance2style_forward.1
$region0: #{dance2style_forward.1}
  #allocation0 [shape = 'u32[]', space=smem, size = 0x4, offset = 0x4, fixed_abs, tag = 'smem constant byte address 0x4 - core index']
  #allocation1 [shape = 'u32[144,128]{1,0:T(1,128)}', space=vmem, size = 0x12000, scoped, tag = 'internal scratch']
  %s0 = inlined_call_operand.vmem [shape: f32[8,16], index: 0, kind: input, shape index: {}]
  %s1 = inlined_call_operand.vmem [shape: f32[16,512], index: 1, kind: input, shape index: {}]
  %s2 = inlined_call_operand.hbm [shape: f32[512,256], index: 2, kind: input, shape index: {}]
  %s3 = inlined_call_operand.hbm [shape: f32[256,128], index: 3, kind: input, shape index: {}]
  %s4 = inlined_call_operand.vmem [shape: f32[128,32], index: 4, kind: input, shape index: {}]
  %s5 = inlined_call_operand.vmem [shape: f32[10,512], index: 5, kind: input, shape index: {}]
  %s6 = inlined_call_operand.vmem [shape: f32[8,32], index: 6, kind: output, shape index: {}]
  %s7 = sld [smem:[#allocation0]]
  $region42: #{dance2style_forward.1} parent=0
    _
  %s9 = ssub.s32 1, %s7
  %s10 = scalar_select 0, %s9, %s7
  $region1: #{dance2style_forward.1} parent=0
    #allocation2 [shape = 'u8[524288]{0}', space=vmem, size = 0x80000, scoped, tag = 'input window, operand 2, single buffered']
    #allocation3 [shape = 's32[1]{0}', space=sflag, size = 0x4, scoped, tag = 'scoped memory for dance2style_forward.1']
    #allocation4 [shape = 'u8[131072]{0}', space=vmem, size = 0x20000, scoped, tag = 'input window, operand 3, single buffered']
    #allocation5 [shape = 's32[1]{0}', space=sflag, size = 0x4, scoped, tag = 'scoped memory for dance2style_forward.1']
    %11 = vsyncpa [#allocation3], 0
    %12 = vsyncpa [#allocation5], 0
    // Predicated region
    $region2: #{dance2style_forward.1} parent=1 // pred_check
      _
    $region3: #{dance2style_forward.1} parent=1 // pred_check_branch
      %14 = sbr.rel (0) target = $region5
    $region4: #{dance2style_forward.1} parent=1 // pred_region
      _
    $region5: #{dance2style_forward.1} parent=1 // pred_fallthru
      _
    // Predicated region
    $region6: #{dance2style_forward.1} parent=1 // pred_check
      _
    $region7: #{dance2style_forward.1} parent=1 // pred_check_branch
      %16 = sbr.rel (0) target = $region9
    $region8: #{dance2style_forward.1} parent=1 // pred_region
      _
    $region9: #{dance2style_forward.1} parent=1 // pred_fallthru
      _
    // Predicated region
    $region10: #{dance2style_forward.1} parent=1 // pred_check
      _
    $region11: #{dance2style_forward.1} parent=1 // pred_check_branch
      %18 = sbr.rel (0) target = $region13
    $region12: #{dance2style_forward.1} parent=1 // pred_region
      %s20 = ssub.s32 16384, 16384
      %21 = vsyncadd [#allocation3], %s20
      %s22 = sshll.u32 [#allocation2], 4
      %s23 = int_to_ptr.vmem [resolvable:$true] %s22
      %28 = dma.hbm_to_vmem [thread:$0]  %s2, 16384, %s23, [#allocation3], 256, 256, 16
    $region13: #{dance2style_forward.1} parent=1 // pred_fallthru
      _
    // Predicated region
    $region14: #{dance2style_forward.1} parent=1 // pred_check
      _
    $region15: #{dance2style_forward.1} parent=1 // pred_check_branch
      %30 = sbr.rel (0) target = $region17
    $region16: #{dance2style_forward.1} parent=1 // pred_region
      %s32 = ssub.s32 4096, 4096
      %33 = vsyncadd [#allocation5], %s32
      %s34 = sshll.u32 [#allocation4], 4
      %s35 = int_to_ptr.vmem [resolvable:$true] %s34
      %40 = dma.hbm_to_vmem [thread:$0]  %s3, 4096, %s35, [#allocation5], 128, 128, 8
    $region17: #{dance2style_forward.1} parent=1 // pred_fallthru
      _
    // Predicated region
    $region18: #{dance2style_forward.1} parent=1 // pred_check
      _
    $region19: #{dance2style_forward.1} parent=1 // pred_check_branch
      %42 = sbr.rel (0) target = $region21
    $region20: #{dance2style_forward.1} parent=1 // pred_region
      _
    $region21: #{dance2style_forward.1} parent=1 // pred_fallthru
      _
    // Predicated region
    $region22: #{dance2style_forward.1} parent=1 // pred_check
      _
    $region23: #{dance2style_forward.1} parent=1 // pred_check_branch
      %44 = sbr.rel (0) target = $region25
    $region24: #{dance2style_forward.1} parent=1 // pred_region
      _
    $region25: #{dance2style_forward.1} parent=1 // pred_fallthru
      _
    // Predicated region
    $region26: #{dance2style_forward.1} parent=1 // pred_check
      _
    $region27: #{dance2style_forward.1} parent=1 // pred_check_branch
      %46 = sbr.rel (0) target = $region29
    $region28: #{dance2style_forward.1} parent=1 // pred_region
      %47 = dma.done [#allocation3], 16384
    $region29: #{dance2style_forward.1} parent=1 // pred_fallthru
      _
    // Predicated region
    $region30: #{dance2style_forward.1} parent=1 // pred_check
      _
    $region31: #{dance2style_forward.1} parent=1 // pred_check_branch
      %49 = sbr.rel (0) target = $region33
    $region32: #{dance2style_forward.1} parent=1 // pred_region
      %50 = dma.done [#allocation5], 4096
    $region33: #{dance2style_forward.1} parent=1 // pred_fallthru
      _
    %v51 = vld [vmem:[%s5] sm:$0xff]
    %v52 = vld [vmem:[%s5 + $0x8] sm:$0xff]
    %v53 = vld [vmem:[%s5 + $0x10] sm:$0xff]
    %v54 = vld [vmem:[%s5 + $0x18] sm:$0xff]
    %v55 = vld [vmem:[%s5 + $0x20] sm:$0x3]
    %v56 = vld [vmem:[%s0] sm:$0xff]
    %v57 = vld [vmem:[%s1] sm:$0xff]
    %v58 = vld [vmem:[%s1 + $0x8] sm:$0xff]
    %v59 = vld [vmem:[%s1 + $0x10] sm:$0xff]
    %v60 = vld [vmem:[%s1 + $0x18] sm:$0xff]
    %v61 = vld [vmem:[%s1 + $0x20] sm:$0xff]
    %v62 = vld [vmem:[%s1 + $0x28] sm:$0xff]
    %v63 = vld [vmem:[%s1 + $0x30] sm:$0xff]
    %v64 = vld [vmem:[%s1 + $0x38] sm:$0xff]
    %v65 = vlaneseq
    %v66 = vshrl.u32 %v65, 7
    %v67 = vsub.s32 0, %v66
    %v68 = vrot.slane %v51, %v67
    %v69 = vlaneseq
    %v70 = vshrl.u32 %v69, 7
    %v71 = vsub.s32 0, %v70
    %v72 = vrot.slane %v52, %v71
    %v73 = vlaneseq
    %v74 = vshrl.u32 %v73, 7
    %v75 = vsub.s32 0, %v74
    %v76 = vrot.slane %v53, %v75
    %v77 = vlaneseq
    %v78 = vshrl.u32 %v77, 7
    %v79 = vsub.s32 0, %v78
    %v80 = vrot.slane %v54, %v79
    %vm81 = vcmask 130048
    %v83 = vsel %vm81, %v56, 0
    %85 = vmatprep.subr.mxu0 %v58
    %86 = vmatpush1.msra.mxu0 %v57
    %87 = vmatprep.subr.mxu0 %v62
    %88 = vmatpush1.msra.mxu0 %v61
    %89 = vmatprep.subr.mxu0 0.0
    %90 = vmatpush1.msra.mxu0 0.0
    %91 = vmatprep.subr.mxu0 0.0
    %92 = vmatpush1.msra.mxu0 0.0
    %93 = vmatprep.subr.mxu0 0.0
    %94 = vmatpush1.msra.mxu0 0.0
    %95 = vmatprep.subr.mxu0 0.0
    %96 = vmatpush1.msra.mxu0 0.0
    %97 = vmatprep.subr.mxu0 0.0
    %98 = vmatpush1.msra.mxu0 0.0
    %99 = vmatprep.subr.mxu0 0.0
    %100 = vmatpush1.msra.mxu0 0.0
    %101 = vmatprep.subr.mxu0 0.0
    %102 = vmatpush1.msra.mxu0 0.0
    %103 = vmatprep.subr.mxu0 0.0
    %104 = vmatpush1.msra.mxu0 0.0
    %105 = vmatprep.subr.mxu0 0.0
    %106 = vmatpush1.msra.mxu0 0.0
    %107 = vmatprep.subr.mxu0 0.0
    %108 = vmatpush1.msra.mxu0 0.0
    %109 = vmatprep.subr.mxu0 0.0
    %110 = vmatpush1.msra.mxu0 0.0
    %111 = vmatprep.subr.mxu0 0.0
    %112 = vmatpush1.msra.mxu0 0.0
    %113 = vmatprep.subr.mxu0 0.0
    %114 = vmatpush1.msra.mxu0 0.0
    %115 = vmatprep.subr.mxu0 0.0
    %116 = vmatpush1.msra.mxu0 0.0
    %117 = vmatprep.subr.mxu0 0.0
    %118 = vmatpush1.msra.mxu0 0.0
    %119 = vmatprep.subr.mxu0 0.0
    %120 = vmatpush1.msra.mxu0 0.0
    %121 = vmatprep.subr.mxu0 0.0
    %122 = vmatpush1.msra.mxu0 0.0
    %123 = vmatprep.subr.mxu0 0.0
    %124 = vmatpush1.msra.mxu0 0.0
    %125 = vmatprep.subr.mxu0 0.0
    %126 = vmatpush1.msra.mxu0 0.0
    %127 = vmatprep.subr.mxu0 0.0
    %128 = vmatpush1.msra.mxu0 0.0
    %129 = vmatprep.subr.mxu0 0.0
    %130 = vmatpush1.msra.mxu0 0.0
    %131 = vmatprep.subr.mxu0 0.0
    %132 = vmatpush1.msra.mxu0 0.0
    %133 = vmatprep.subr.mxu0 0.0
    %134 = vmatpush1.msra.mxu0 0.0
    %135 = vmatprep.subr.mxu0 0.0
    %136 = vmatpush1.msra.mxu0 0.0
    %137 = vmatprep.subr.mxu0 0.0
    %138 = vmatpush1.msra.mxu0 0.0
    %139 = vmatprep.subr.mxu0 0.0
    %140 = vmatpush1.msra.mxu0 0.0
    %141 = vmatprep.subr.mxu0 0.0
    %142 = vmatpush1.msra.mxu0 0.0
    %143 = vmatprep.subr.mxu0 0.0
    %144 = vmatpush1.msra.mxu0 0.0
    %145 = vmatprep.subr.mxu0 0.0
    %146 = vmatpush1.msra.mxu0 0.0
    %147 = vmatprep.subr.mxu0 0.0
    %148 = vmatpush1.msra.mxu0 0.0
    %149 = vmatprep.mubr.f32.mxu0 0.0
    %150 = vmatmul.mubr.f32.gmra.mrb[0].mxu0 %v83
    %v151 = vpop.f32.mrb[0].mxu0
    %v152 = vadd.f32 %v68, %v151
    %v153 = vpop.f32.mrb[0].mxu0
    %v154 = vadd.f32 %v72, %v153
    %155 = vdwg.mxu0
    %156 = vmatprep.subr.mxu0 %v60
    %157 = vmatpush1.msra.mxu0 %v59
    %158 = vmatprep.subr.mxu0 %v64
    %159 = vmatpush1.msra.mxu0 %v63
    %160 = vmatprep.subr.mxu0 0.0
    %161 = vmatpush1.msra.mxu0 0.0
    %162 = vmatprep.subr.mxu0 0.0
    %163 = vmatpush1.msra.mxu0 0.0
    %164 = vmatprep.subr.mxu0 0.0
    %165 = vmatpush1.msra.mxu0 0.0
    %166 = vmatprep.subr.mxu0 0.0
    %167 = vmatpush1.msra.mxu0 0.0
    %168 = vmatprep.subr.mxu0 0.0
    %169 = vmatpush1.msra.mxu0 0.0
    %170 = vmatprep.subr.mxu0 0.0
    %171 = vmatpush1.msra.mxu0 0.0
    %172 = vmatprep.subr.mxu0 0.0
    %173 = vmatpush1.msra.mxu0 0.0
    %174 = vmatprep.subr.mxu0 0.0
    %175 = vmatpush1.msra.mxu0 0.0
    %176 = vmatprep.subr.mxu0 0.0
    %177 = vmatpush1.msra.mxu0 0.0
    %178 = vmatprep.subr.mxu0 0.0
    %179 = vmatpush1.msra.mxu0 0.0
    %180 = vmatprep.subr.mxu0 0.0
    %181 = vmatpush1.msra.mxu0 0.0
    %182 = vmatprep.subr.mxu0 0.0
    %183 = vmatpush1.msra.mxu0 0.0
    %184 = vmatprep.subr.mxu0 0.0
    %185 = vmatpush1.msra.mxu0 0.0
    %186 = vmatprep.subr.mxu0 0.0
    %187 = vmatpush1.msra.mxu0 0.0
    %188 = vmatprep.subr.mxu0 0.0
    %189 = vmatpush1.msra.mxu0 0.0
    %190 = vmatprep.subr.mxu0 0.0
    %191 = vmatpush1.msra.mxu0 0.0
    %192 = vmatprep.subr.mxu0 0.0
    %193 = vmatpush1.msra.mxu0 0.0
    %194 = vmatprep.subr.mxu0 0.0
    %195 = vmatpush1.msra.mxu0 0.0
    %196 = vmatprep.subr.mxu0 0.0
    %197 = vmatpush1.msra.mxu0 0.0
    %198 = vmatprep.subr.mxu0 0.0
    %199 = vmatpush1.msra.mxu0 0.0
    %200 = vmatprep.subr.mxu0 0.0
    %201 = vmatpush1.msra.mxu0 0.0
    %202 = vmatprep.subr.mxu0 0.0
    %203 = vmatpush1.msra.mxu0 0.0
    %204 = vmatprep.subr.mxu0 0.0
    %205 = vmatpush1.msra.mxu0 0.0
    %206 = vmatprep.subr.mxu0 0.0
    %207 = vmatpush1.msra.mxu0 0.0
    %208 = vmatprep.subr.mxu0 0.0
    %209 = vmatpush1.msra.mxu0 0.0
    %210 = vmatprep.subr.mxu0 0.0
    %211 = vmatpush1.msra.mxu0 0.0
    %212 = vmatprep.subr.mxu0 0.0
    %213 = vmatpush1.msra.mxu0 0.0
    %214 = vmatprep.subr.mxu0 0.0
    %215 = vmatpush1.msra.mxu0 0.0
    %216 = vmatprep.subr.mxu0 0.0
    %217 = vmatpush1.msra.mxu0 0.0
    %218 = vmatprep.subr.mxu0 0.0
    %219 = vmatpush1.msra.mxu0 0.0
    %220 = vmatprep.mubr.f32.mxu0 0.0
    %221 = vmatmul.mubr.f32.gmra.mrb[0].mxu0 %v83
    %v222 = vpop.f32.mrb[0].mxu0
    %v223 = vadd.f32 %v76, %v222
    %v224 = vpop.f32.mrb[0].mxu0
    %v225 = vadd.f32 %v80, %v224
    %226 = vdwg.mxu0
    %v227 = vadd.f32 %v152, %v154
    %v228 = vadd.f32 %v227, %v223
    %v229 = vadd.f32 %v228, %v225
    %230 = vadd.xlane.f32.xlu0 %v229
    %v231 = vpop.xlane.xlu0 %230
    %v232 = vrcp.pop 512.0
    %v233 = vmul.f32 %v231, %v232
    %v234 = vmul.f32 %v152, %v152
    %v235 = vmul.f32 %v154, %v154
    %v236 = vmul.f32 %v223, %v223
    %v237 = vmul.f32 %v225, %v225
    %v238 = vadd.f32 %v234, %v235
    %v239 = vadd.f32 %v238, %v236
    %v240 = vadd.f32 %v239, %v237
    %241 = vadd.xlane.f32.xlu0 %v240
    %v242 = vpop.xlane.xlu0 %241
    %v243 = vmul.f32 %v242, %v232
    %v244 = vmul.f32 %v233, %v233
    %v245 = vsub.f32 %v243, %v244
    %v246 = vsub.f32 %v152, %v233
    %v247 = vsub.f32 %v154, %v233
    %v248 = vsub.f32 %v223, %v233
    %v249 = vsub.f32 %v225, %v233
    %v250 = vadd.f32 %v245, 1e-05
    %v251 = vrsqrt.pop %v250
    %v252 = vmul.f32 %v246, %v251
    %v253 = vmul.f32 %v247, %v251
    %v254 = vmul.f32 %v248, %v251
    %v255 = vmul.f32 %v249, %v251
    %v256 = vlaneseq
    %v257 = vshrl.u32 %v256, 7
    %v258 = vsub.s32 1, %v257
    %v259 = vrot.slane %v51, %v258
    %v260 = vlaneseq
    %v261 = vshrl.u32 %v260, 7
    %v262 = vsub.s32 1, %v261
    %v263 = vrot.slane %v52, %v262
    %v264 = vlaneseq
    %v265 = vshrl.u32 %v264, 7
    %v266 = vsub.s32 1, %v265
    %v267 = vrot.slane %v53, %v266
    %v268 = vlaneseq
    %v269 = vshrl.u32 %v268, 7
    %v270 = vsub.s32 1, %v269
    %v271 = vrot.slane %v54, %v270
    %v272 = vmul.f32 %v252, %v259
    %v273 = vmul.f32 %v253, %v263
    %v274 = vmul.f32 %v254, %v267
    %v275 = vmul.f32 %v255, %v271
    %v276 = vlaneseq
    %v277 = vshrl.u32 %v276, 7
    %v278 = vsub.s32 2, %v277
    %v279 = vrot.slane %v51, %v278
    %v280 = vlaneseq
    %v281 = vshrl.u32 %v280, 7
    %v282 = vsub.s32 2, %v281
    %v283 = vrot.slane %v52, %v282
    %v284 = vlaneseq
    %v285 = vshrl.u32 %v284, 7
    %v286 = vsub.s32 2, %v285
    %v287 = vrot.slane %v53, %v286
    %v288 = vlaneseq
    %v289 = vshrl.u32 %v288, 7
    %v290 = vsub.s32 2, %v289
    %v291 = vrot.slane %v54, %v290
    %v292 = vadd.f32 %v272, %v279
    %v293 = vadd.f32 %v273, %v283
    %v294 = vadd.f32 %v274, %v287
    %v295 = vadd.f32 %v275, %v291
    %v296 = vmul.f32 %v292, 0.2
    %v297 = vmul.f32 %v293, 0.2
    %v298 = vmul.f32 %v294, 0.2
    %v299 = vmul.f32 %v295, 0.2
    %v300 = vmax.f32 %v292, %v296
    %v301 = vmax.f32 %v293, %v297
    %v302 = vmax.f32 %v294, %v298
    %v303 = vmax.f32 %v295, %v299
    %v304 = vld [vmem:[#allocation2] sm:$0xff]
    %v305 = vld [vmem:[#allocation2 + $0x8] sm:$0xff]
    %v306 = vld [vmem:[#allocation2 + $0x10] sm:$0xff]
    %v307 = vld [vmem:[#allocation2 + $0x18] sm:$0xff]
    %v308 = vld [vmem:[#allocation2 + $0x20] sm:$0xff]
    %v309 = vld [vmem:[#allocation2 + $0x28] sm:$0xff]
    %v310 = vld [vmem:[#allocation2 + $0x30] sm:$0xff]
    %v311 = vld [vmem:[#allocation2 + $0x38] sm:$0xff]
    %v312 = vld [vmem:[#allocation2 + $0x40] sm:$0xff]
    %v313 = vld [vmem:[#allocation2 + $0x48] sm:$0xff]
    %v314 = vld [vmem:[#allocation2 + $0x50] sm:$0xff]
    %v315 = vld [vmem:[#allocation2 + $0x58] sm:$0xff]
    %v316 = vld [vmem:[#allocation2 + $0x60] sm:$0xff]
    %v317 = vld [vmem:[#allocation2 + $0x68] sm:$0xff]
    %v318 = vld [vmem:[#allocation2 + $0x70] sm:$0xff]
    %v319 = vld [vmem:[#allocation2 + $0x78] sm:$0xff]
    %v320 = vld [vmem:[#allocation2 + $0x80] sm:$0xff]
    %v321 = vld [vmem:[#allocation2 + $0x88] sm:$0xff]
    %v322 = vld [vmem:[#allocation2 + $0x90] sm:$0xff]
    %v323 = vld [vmem:[#allocation2 + $0x98] sm:$0xff]
    %v324 = vld [vmem:[#allocation2 + $0xa0] sm:$0xff]
    %v325 = vld [vmem:[#allocation2 + $0xa8] sm:$0xff]
    %v326 = vld [vmem:[#allocation2 + $0xb0] sm:$0xff]
    %v327 = vld [vmem:[#allocation2 + $0xb8] sm:$0xff]
    %v328 = vld [vmem:[#allocation2 + $0xc0] sm:$0xff]
    %v329 = vld [vmem:[#allocation2 + $0xc8] sm:$0xff]
    %v330 = vld [vmem:[#allocation2 + $0xd0] sm:$0xff]
    %v331 = vld [vmem:[#allocation2 + $0xd8] sm:$0xff]
    %v332 = vld [vmem:[#allocation2 + $0xe0] sm:$0xff]
    %v333 = vld [vmem:[#allocation2 + $0xe8] sm:$0xff]
    %v334 = vld [vmem:[#allocation2 + $0xf0] sm:$0xff]
    %v335 = vld [vmem:[#allocation2 + $0xf8] sm:$0xff]
    %v336 = vld [vmem:[#allocation2 + $0x100] sm:$0xff]
    %v337 = vld [vmem:[#allocation2 + $0x108] sm:$0xff]
    %v338 = vld [vmem:[#allocation2 + $0x110] sm:$0xff]
    %v339 = vld [vmem:[#allocation2 + $0x118] sm:$0xff]
    %v340 = vld [vmem:[#allocation2 + $0x120] sm:$0xff]
    %v341 = vld [vmem:[#allocation2 + $0x128] sm:$0xff]
    %v342 = vld [vmem:[#allocation2 + $0x130] sm:$0xff]
    %v343 = vld [vmem:[#allocation2 + $0x138] sm:$0xff]
    %v344 = vld [vmem:[#allocation2 + $0x140] sm:$0xff]
    %v345 = vld [vmem:[#allocation2 + $0x148] sm:$0xff]
    %v346 = vld [vmem:[#allocation2 + $0x150] sm:$0xff]
    %v347 = vld [vmem:[#allocation2 + $0x158] sm:$0xff]
    %v348 = vld [vmem:[#allocation2 + $0x160] sm:$0xff]
    %v349 = vld [vmem:[#allocation2 + $0x168] sm:$0xff]
    %v350 = vld [vmem:[#allocation2 + $0x170] sm:$0xff]
    %v351 = vld [vmem:[#allocation2 + $0x178] sm:$0xff]
    %v352 = vld [vmem:[#allocation2 + $0x180] sm:$0xff]
    %v353 = vld [vmem:[#allocation2 + $0x188] sm:$0xff]
    %v354 = vld [vmem:[#allocation2 + $0x190] sm:$0xff]
    %v355 = vld [vmem:[#allocation2 + $0x198] sm:$0xff]
    %v356 = vld [vmem:[#allocation2 + $0x1a0] sm:$0xff]
    %v357 = vld [vmem:[#allocation2 + $0x1a8] sm:$0xff]
    %v358 = vld [vmem:[#allocation2 + $0x1b0] sm:$0xff]
    %v359 = vld [vmem:[#allocation2 + $0x1b8] sm:$0xff]
    %v360 = vld [vmem:[#allocation2 + $0x1c0] sm:$0xff]
    %v361 = vld [vmem:[#allocation2 + $0x1c8] sm:$0xff]
    %v362 = vld [vmem:[#allocation2 + $0x1d0] sm:$0xff]
    %v363 = vld [vmem:[#allocation2 + $0x1d8] sm:$0xff]
    %v364 = vld [vmem:[#allocation2 + $0x1e0] sm:$0xff]
    %v365 = vld [vmem:[#allocation2 + $0x1e8] sm:$0xff]
    %v366 = vld [vmem:[#allocation2 + $0x1f0] sm:$0xff]
    %v367 = vld [vmem:[#allocation2 + $0x1f8] sm:$0xff]
    %v368 = vld [vmem:[#allocation2 + $0x200] sm:$0xff]
    %v369 = vld [vmem:[#allocation2 + $0x208] sm:$0xff]
    %v370 = vld [vmem:[#allocation2 + $0x210] sm:$0xff]
    %v371 = vld [vmem:[#allocation2 + $0x218] sm:$0xff]
    %v372 = vld [vmem:[#allocation2 + $0x220] sm:$0xff]
    %v373 = vld [vmem:[#allocation2 + $0x228] sm:$0xff]
    %v374 = vld [vmem:[#allocation2 + $0x230] sm:$0xff]
    %v375 = vld [vmem:[#allocation2 + $0x238] sm:$0xff]
    %v376 = vld [vmem:[#allocation2 + $0x240] sm:$0xff]
    %v377 = vld [vmem:[#allocation2 + $0x248] sm:$0xff]
    %v378 = vld [vmem:[#allocation2 + $0x250] sm:$0xff]
    %v379 = vld [vmem:[#allocation2 + $0x258] sm:$0xff]
    %v380 = vld [vmem:[#allocation2 + $0x260] sm:$0xff]
    %v381 = vld [vmem:[#allocation2 + $0x268] sm:$0xff]
    %v382 = vld [vmem:[#allocation2 + $0x270] sm:$0xff]
    %v383 = vld [vmem:[#allocation2 + $0x278] sm:$0xff]
    %v384 = vld [vmem:[#allocation2 + $0x280] sm:$0xff]
    %v385 = vld [vmem:[#allocation2 + $0x288] sm:$0xff]
    %v386 = vld [vmem:[#allocation2 + $0x290] sm:$0xff]
    %v387 = vld [vmem:[#allocation2 + $0x298] sm:$0xff]
    %v388 = vld [vmem:[#allocation2 + $0x2a0] sm:$0xff]
    %v389 = vld [vmem:[#allocation2 + $0x2a8] sm:$0xff]
    %v390 = vld [vmem:[#allocation2 + $0x2b0] sm:$0xff]
    %v391 = vld [vmem:[#allocation2 + $0x2b8] sm:$0xff]
    %v392 = vld [vmem:[#allocation2 + $0x2c0] sm:$0xff]
    %v393 = vld [vmem:[#allocation2 + $0x2c8] sm:$0xff]
    %v394 = vld [vmem:[#allocation2 + $0x2d0] sm:$0xff]
    %v395 = vld [vmem:[#allocation2 + $0x2d8] sm:$0xff]
    %v396 = vld [vmem:[#allocation2 + $0x2e0] sm:$0xff]
    %v397 = vld [vmem:[#allocation2 + $0x2e8] sm:$0xff]
    %v398 = vld [vmem:[#allocation2 + $0x2f0] sm:$0xff]
    %v399 = vld [vmem:[#allocation2 + $0x2f8] sm:$0xff]
    %v400 = vld [vmem:[#allocation2 + $0x300] sm:$0xff]
    %v401 = vld [vmem:[#allocation2 + $0x308] sm:$0xff]
    %v402 = vld [vmem:[#allocation2 + $0x310] sm:$0xff]
    %v403 = vld [vmem:[#allocation2 + $0x318] sm:$0xff]
    %v404 = vld [vmem:[#allocation2 + $0x320] sm:$0xff]
    %v405 = vld [vmem:[#allocation2 + $0x328] sm:$0xff]
    %v406 = vld [vmem:[#allocation2 + $0x330] sm:$0xff]
    %v407 = vld [vmem:[#allocation2 + $0x338] sm:$0xff]
    %v408 = vld [vmem:[#allocation2 + $0x340] sm:$0xff]
    %v409 = vld [vmem:[#allocation2 + $0x348] sm:$0xff]
    %v410 = vld [vmem:[#allocation2 + $0x350] sm:$0xff]
    %v411 = vld [vmem:[#allocation2 + $0x358] sm:$0xff]
    %v412 = vld [vmem:[#allocation2 + $0x360] sm:$0xff]
    %v413 = vld [vmem:[#allocation2 + $0x368] sm:$0xff]
    %v414 = vld [vmem:[#allocation2 + $0x370] sm:$0xff]
    %v415 = vld [vmem:[#allocation2 + $0x378] sm:$0xff]
    %v416 = vld [vmem:[#allocation2 + $0x380] sm:$0xff]
    %v417 = vld [vmem:[#allocation2 + $0x388] sm:$0xff]
    %v418 = vld [vmem:[#allocation2 + $0x390] sm:$0xff]
    %v419 = vld [vmem:[#allocation2 + $0x398] sm:$0xff]
    %v420 = vld [vmem:[#allocation2 + $0x3a0] sm:$0xff]
    %v421 = vld [vmem:[#allocation2 + $0x3a8] sm:$0xff]
    %v422 = vld [vmem:[#allocation2 + $0x3b0] sm:$0xff]
    %v423 = vld [vmem:[#allocation2 + $0x3b8] sm:$0xff]
    %v424 = vld [vmem:[#allocation2 + $0x3c0] sm:$0xff]
    %v425 = vld [vmem:[#allocation2 + $0x3c8] sm:$0xff]
    %v426 = vld [vmem:[#allocation2 + $0x3d0] sm:$0xff]
    %v427 = vld [vmem:[#allocation2 + $0x3d8] sm:$0xff]
    %v428 = vld [vmem:[#allocation2 + $0x3e0] sm:$0xff]
    %v429 = vld [vmem:[#allocation2 + $0x3e8] sm:$0xff]
    %v430 = vld [vmem:[#allocation2 + $0x3f0] sm:$0xff]
    %v431 = vld [vmem:[#allocation2 + $0x3f8] sm:$0xff]
    %v432 = vlaneseq
    %v433 = vshrl.u32 %v432, 7
    %v434 = vsub.s32 3, %v433
    %v435 = vrot.slane %v51, %v434
    %v436 = vlaneseq
    %v437 = vshrl.u32 %v436, 7
    %v438 = vsub.s32 3, %v437
    %v439 = vrot.slane %v52, %v438
    %440 = vmatprep.subr.mxu0 %v305
    %441 = vmatpush1.msra.mxu0 %v304
    %442 = vmatprep.subr.mxu0 %v307
    %443 = vmatpush1.msra.mxu0 %v306
    %444 = vmatprep.subr.mxu0 %v309
    %445 = vmatpush1.msra.mxu0 %v308
    %446 = vmatprep.subr.mxu0 %v311
    %447 = vmatpush1.msra.mxu0 %v310
    %448 = vmatprep.subr.mxu0 %v313
    %449 = vmatpush1.msra.mxu0 %v312
    %450 = vmatprep.subr.mxu0 %v315
    %451 = vmatpush1.msra.mxu0 %v314
    %452 = vmatprep.subr.mxu0 %v317
    %453 = vmatpush1.msra.mxu0 %v316
    %454 = vmatprep.subr.mxu0 %v319
    %455 = vmatpush1.msra.mxu0 %v318
    %456 = vmatprep.subr.mxu0 %v321
    %457 = vmatpush1.msra.mxu0 %v320
    %458 = vmatprep.subr.mxu0 %v323
    %459 = vmatpush1.msra.mxu0 %v322
    %460 = vmatprep.subr.mxu0 %v325
    %461 = vmatpush1.msra.mxu0 %v324
    %462 = vmatprep.subr.mxu0 %v327
    %463 = vmatpush1.msra.mxu0 %v326
    %464 = vmatprep.subr.mxu0 %v329
    %465 = vmatpush1.msra.mxu0 %v328
    %466 = vmatprep.subr.mxu0 %v331
    %467 = vmatpush1.msra.mxu0 %v330
    %468 = vmatprep.subr.mxu0 %v333
    %469 = vmatpush1.msra.mxu0 %v332
    %470 = vmatprep.subr.mxu0 %v335
    %471 = vmatpush1.msra.mxu0 %v334
    %472 = vmatprep.subr.mxu0 %v337
    %473 = vmatpush1.msra.mxu0 %v336
    %474 = vmatprep.subr.mxu0 %v339
    %475 = vmatpush1.msra.mxu0 %v338
    %476 = vmatprep.subr.mxu0 %v341
    %477 = vmatpush1.msra.mxu0 %v340
    %478 = vmatprep.subr.mxu0 %v343
    %479 = vmatpush1.msra.mxu0 %v342
    %480 = vmatprep.subr.mxu0 %v345
    %481 = vmatpush1.msra.mxu0 %v344
    %482 = vmatprep.subr.mxu0 %v347
    %483 = vmatpush1.msra.mxu0 %v346
    %484 = vmatprep.subr.mxu0 %v349
    %485 = vmatpush1.msra.mxu0 %v348
    %486 = vmatprep.subr.mxu0 %v351
    %487 = vmatpush1.msra.mxu0 %v350
    %488 = vmatprep.subr.mxu0 %v353
    %489 = vmatpush1.msra.mxu0 %v352
    %490 = vmatprep.subr.mxu0 %v355
    %491 = vmatpush1.msra.mxu0 %v354
    %492 = vmatprep.subr.mxu0 %v357
    %493 = vmatpush1.msra.mxu0 %v356
    %494 = vmatprep.subr.mxu0 %v359
    %495 = vmatpush1.msra.mxu0 %v358
    %496 = vmatprep.subr.mxu0 %v361
    %497 = vmatpush1.msra.mxu0 %v360
    %498 = vmatprep.subr.mxu0 %v363
    %499 = vmatpush1.msra.mxu0 %v362
    %500 = vmatprep.subr.mxu0 %v365
    %501 = vmatpush1.msra.mxu0 %v364
    %502 = vmatprep.subr.mxu0 %v367
    %503 = vmatpush1.msra.mxu0 %v366
    %504 = vmatprep.mubr.f32.mxu0 %v301
    %505 = vmatmul.mubr.f32.gmra.mrb[0].mxu0 %v300
    %v506 = vpop.f32.mrb[0].mxu0
    %v507 = vadd.f32 %v435, %v506
    %v508 = vpop.f32.mrb[0].mxu0
    %v509 = vadd.f32 %v439, %v508
    %510 = vdwg.mxu0
    %511 = vmatprep.subr.mxu0 %v369
    %512 = vmatpush1.msra.mxu0 %v368
    %513 = vmatprep.subr.mxu0 %v371
    %514 = vmatpush1.msra.mxu0 %v370
    %515 = vmatprep.subr.mxu0 %v373
    %516 = vmatpush1.msra.mxu0 %v372
    %517 = vmatprep.subr.mxu0 %v375
    %518 = vmatpush1.msra.mxu0 %v374
    %519 = vmatprep.subr.mxu0 %v377
    %520 = vmatpush1.msra.mxu0 %v376
    %521 = vmatprep.subr.mxu0 %v379
    %522 = vmatpush1.msra.mxu0 %v378
    %523 = vmatprep.subr.mxu0 %v381
    %524 = vmatpush1.msra.mxu0 %v380
    %525 = vmatprep.subr.mxu0 %v383
    %526 = vmatpush1.msra.mxu0 %v382
    %527 = vmatprep.subr.mxu0 %v385
    %528 = vmatpush1.msra.mxu0 %v384
    %529 = vmatprep.subr.mxu0 %v387
    %530 = vmatpush1.msra.mxu0 %v386
    %531 = vmatprep.subr.mxu0 %v389
    %532 = vmatpush1.msra.mxu0 %v388
    %533 = vmatprep.subr.mxu0 %v391
    %534 = vmatpush1.msra.mxu0 %v390
    %535 = vmatprep.subr.mxu0 %v393
    %536 = vmatpush1.msra.mxu0 %v392
    %537 = vmatprep.subr.mxu0 %v395
    %538 = vmatpush1.msra.mxu0 %v394
    %539 = vmatprep.subr.mxu0 %v397
    %540 = vmatpush1.msra.mxu0 %v396
    %541 = vmatprep.subr.mxu0 %v399
    %542 = vmatpush1.msra.mxu0 %v398
    %543 = vmatprep.subr.mxu0 %v401
    %544 = vmatpush1.msra.mxu0 %v400
    %545 = vmatprep.subr.mxu0 %v403
    %546 = vmatpush1.msra.mxu0 %v402
    %547 = vmatprep.subr.mxu0 %v405
    %548 = vmatpush1.msra.mxu0 %v404
    %549 = vmatprep.subr.mxu0 %v407
    %550 = vmatpush1.msra.mxu0 %v406
    %551 = vmatprep.subr.mxu0 %v409
    %552 = vmatpush1.msra.mxu0 %v408
    %553 = vmatprep.subr.mxu0 %v411
    %554 = vmatpush1.msra.mxu0 %v410
    %555 = vmatprep.subr.mxu0 %v413
    %556 = vmatpush1.msra.mxu0 %v412
    %557 = vmatprep.subr.mxu0 %v415
    %558 = vmatpush1.msra.mxu0 %v414
    %559 = vmatprep.subr.mxu0 %v417
    %560 = vmatpush1.msra.mxu0 %v416
    %561 = vmatprep.subr.mxu0 %v419
    %562 = vmatpush1.msra.mxu0 %v418
    %563 = vmatprep.subr.mxu0 %v421
    %564 = vmatpush1.msra.mxu0 %v420
    %565 = vmatprep.subr.mxu0 %v423
    %566 = vmatpush1.msra.mxu0 %v422
    %567 = vmatprep.subr.mxu0 %v425
    %568 = vmatpush1.msra.mxu0 %v424
    %569 = vmatprep.subr.mxu0 %v427
    %570 = vmatpush1.msra.mxu0 %v426
    %571 = vmatprep.subr.mxu0 %v429
    %572 = vmatpush1.msra.mxu0 %v428
    %573 = vmatprep.subr.mxu0 %v431
    %574 = vmatpush1.msra.mxu0 %v430
    %575 = vmatprep.mubr.f32.mxu0 %v303
    %576 = vmatmul.mubr.f32.gmra.mrb[0].mxu0 %v302
    %v577 = vpop.f32.mrb[0].mxu0
    %v578 = vadd.f32 %v507, %v577
    %v579 = vpop.f32.mrb[0].mxu0
    %v580 = vadd.f32 %v509, %v579
    %581 = vdwg.mxu0
    %v582 = vadd.f32 %v578, %v580
    %583 = vadd.xlane.f32.xlu0 %v582
    %v584 = vpop.xlane.xlu0 %583
    %v585 = vrcp.pop 256.0
    %v586 = vmul.f32 %v584, %v585
    %v587 = vmul.f32 %v578, %v578
    %v588 = vmul.f32 %v580, %v580
    %v589 = vadd.f32 %v587, %v588
    %590 = vadd.xlane.f32.xlu0 %v589
    %v591 = vpop.xlane.xlu0 %590
    %v592 = vmul.f32 %v591, %v585
    %v593 = vmul.f32 %v586, %v586
    %v594 = vsub.f32 %v592, %v593
    %v595 = vsub.f32 %v578, %v586
    %v596 = vsub.f32 %v580, %v586
    %v597 = vadd.f32 %v594, 1e-05
    %v598 = vrsqrt.pop %v597
    %v599 = vmul.f32 %v595, %v598
    %v600 = vmul.f32 %v596, %v598
    %v601 = vlaneseq
    %v602 = vshrl.u32 %v601, 7
    %v603 = vsub.s32 4, %v602
    %v604 = vrot.slane %v51, %v603
    %v605 = vlaneseq
    %v606 = vshrl.u32 %v605, 7
    %v607 = vsub.s32 4, %v606
    %v608 = vrot.slane %v52, %v607
    %v609 = vmul.f32 %v599, %v604
    %v610 = vmul.f32 %v600, %v608
    %v611 = vlaneseq
    %v612 = vshrl.u32 %v611, 7
    %v613 = vsub.s32 5, %v612
    %v614 = vrot.slane %v51, %v613
    %v615 = vlaneseq
    %v616 = vshrl.u32 %v615, 7
    %v617 = vsub.s32 5, %v616
    %v618 = vrot.slane %v52, %v617
    %v619 = vadd.f32 %v609, %v614
    %v620 = vadd.f32 %v610, %v618
    %v621 = vmul.f32 %v619, 0.2
    %v622 = vmul.f32 %v620, 0.2
    %v623 = vmax.f32 %v619, %v621
    %v624 = vmax.f32 %v620, %v622
    %v625 = vld [vmem:[#allocation4] sm:$0xff]
    %v626 = vld [vmem:[#allocation4 + $0x8] sm:$0xff]
    %v627 = vld [vmem:[#allocation4 + $0x10] sm:$0xff]
    %v628 = vld [vmem:[#allocation4 + $0x18] sm:$0xff]
    %v629 = vld [vmem:[#allocation4 + $0x20] sm:$0xff]
    %v630 = vld [vmem:[#allocation4 + $0x28] sm:$0xff]
    %v631 = vld [vmem:[#allocation4 + $0x30] sm:$0xff]
    %v632 = vld [vmem:[#allocation4 + $0x38] sm:$0xff]
    %v633 = vld [vmem:[#allocation4 + $0x40] sm:$0xff]
    %v634 = vld [vmem:[#allocation4 + $0x48] sm:$0xff]
    %v635 = vld [vmem:[#allocation4 + $0x50] sm:$0xff]
    %v636 = vld [vmem:[#allocation4 + $0x58] sm:$0xff]
    %v637 = vld [vmem:[#allocation4 + $0x60] sm:$0xff]
    %v638 = vld [vmem:[#allocation4 + $0x68] sm:$0xff]
    %v639 = vld [vmem:[#allocation4 + $0x70] sm:$0xff]
    %v640 = vld [vmem:[#allocation4 + $0x78] sm:$0xff]
    %v641 = vld [vmem:[#allocation4 + $0x80] sm:$0xff]
    %v642 = vld [vmem:[#allocation4 + $0x88] sm:$0xff]
    %v643 = vld [vmem:[#allocation4 + $0x90] sm:$0xff]
    %v644 = vld [vmem:[#allocation4 + $0x98] sm:$0xff]
    %v645 = vld [vmem:[#allocation4 + $0xa0] sm:$0xff]
    %v646 = vld [vmem:[#allocation4 + $0xa8] sm:$0xff]
    %v647 = vld [vmem:[#allocation4 + $0xb0] sm:$0xff]
    %v648 = vld [vmem:[#allocation4 + $0xb8] sm:$0xff]
    %v649 = vld [vmem:[#allocation4 + $0xc0] sm:$0xff]
    %v650 = vld [vmem:[#allocation4 + $0xc8] sm:$0xff]
    %v651 = vld [vmem:[#allocation4 + $0xd0] sm:$0xff]
    %v652 = vld [vmem:[#allocation4 + $0xd8] sm:$0xff]
    %v653 = vld [vmem:[#allocation4 + $0xe0] sm:$0xff]
    %v654 = vld [vmem:[#allocation4 + $0xe8] sm:$0xff]
    %v655 = vld [vmem:[#allocation4 + $0xf0] sm:$0xff]
    %v656 = vld [vmem:[#allocation4 + $0xf8] sm:$0xff]
    %v657 = vlaneseq
    %v658 = vshrl.u32 %v657, 7
    %v659 = vsub.s32 6, %v658
    %v660 = vrot.slane %v51, %v659
    %661 = vmatprep.subr.mxu0 0.0
    %662 = vmatpush1.msra.mxu0 %v625
    %663 = vmatprep.subr.mxu0 0.0
    %664 = vmatpush1.msra.mxu0 %v626
    %665 = vmatprep.subr.mxu0 0.0
    %666 = vmatpush1.msra.mxu0 %v627
    %667 = vmatprep.subr.mxu0 0.0
    %668 = vmatpush1.msra.mxu0 %v628
    %669 = vmatprep.subr.mxu0 0.0
    %670 = vmatpush1.msra.mxu0 %v629
    %671 = vmatprep.subr.mxu0 0.0
    %672 = vmatpush1.msra.mxu0 %v630
    %673 = vmatprep.subr.mxu0 0.0
    %674 = vmatpush1.msra.mxu0 %v631
    %675 = vmatprep.subr.mxu0 0.0
    %676 = vmatpush1.msra.mxu0 %v632
    %677 = vmatprep.subr.mxu0 0.0
    %678 = vmatpush1.msra.mxu0 %v633
    %679 = vmatprep.subr.mxu0 0.0
    %680 = vmatpush1.msra.mxu0 %v634
    %681 = vmatprep.subr.mxu0 0.0
    %682 = vmatpush1.msra.mxu0 %v635
    %683 = vmatprep.subr.mxu0 0.0
    %684 = vmatpush1.msra.mxu0 %v636
    %685 = vmatprep.subr.mxu0 0.0
    %686 = vmatpush1.msra.mxu0 %v637
    %687 = vmatprep.subr.mxu0 0.0
    %688 = vmatpush1.msra.mxu0 %v638
    %689 = vmatprep.subr.mxu0 0.0
    %690 = vmatpush1.msra.mxu0 %v639
    %691 = vmatprep.subr.mxu0 0.0
    %692 = vmatpush1.msra.mxu0 %v640
    %693 = vmatprep.subr.mxu0 0.0
    %694 = vmatpush1.msra.mxu0 %v641
    %695 = vmatprep.subr.mxu0 0.0
    %696 = vmatpush1.msra.mxu0 %v642
    %697 = vmatprep.subr.mxu0 0.0
    %698 = vmatpush1.msra.mxu0 %v643
    %699 = vmatprep.subr.mxu0 0.0
    %700 = vmatpush1.msra.mxu0 %v644
    %701 = vmatprep.subr.mxu0 0.0
    %702 = vmatpush1.msra.mxu0 %v645
    %703 = vmatprep.subr.mxu0 0.0
    %704 = vmatpush1.msra.mxu0 %v646
    %705 = vmatprep.subr.mxu0 0.0
    %706 = vmatpush1.msra.mxu0 %v647
    %707 = vmatprep.subr.mxu0 0.0
    %708 = vmatpush1.msra.mxu0 %v648
    %709 = vmatprep.subr.mxu0 0.0
    %710 = vmatpush1.msra.mxu0 %v649
    %711 = vmatprep.subr.mxu0 0.0
    %712 = vmatpush1.msra.mxu0 %v650
    %713 = vmatprep.subr.mxu0 0.0
    %714 = vmatpush1.msra.mxu0 %v651
    %715 = vmatprep.subr.mxu0 0.0
    %716 = vmatpush1.msra.mxu0 %v652
    %717 = vmatprep.subr.mxu0 0.0
    %718 = vmatpush1.msra.mxu0 %v653
    %719 = vmatprep.subr.mxu0 0.0
    %720 = vmatpush1.msra.mxu0 %v654
    %721 = vmatprep.subr.mxu0 0.0
    %722 = vmatpush1.msra.mxu0 %v655
    %723 = vmatprep.subr.mxu0 0.0
    %724 = vmatpush1.msra.mxu0 %v656
    %725 = vmatprep.mubr.f32.mxu0 %v624
    %726 = vmatmul.mubr.f32.gmra.mrb[0].mxu0 %v623
    %v727 = vpop.f32.mrb[0].mxu0
    %v728 = vadd.f32 %v660, %v727
    %v729 = vpop.f32.mrb[0].mxu0
    %730 = vdwg.mxu0
    %731 = vadd.xlane.f32.xlu0 %v728
    %v732 = vpop.xlane.xlu0 %731
    %v733 = vrcp.pop 128.0
    %v734 = vmul.f32 %v732, %v733
    %v735 = vmul.f32 %v728, %v728
    %736 = vadd.xlane.f32.xlu0 %v735
    %v737 = vpop.xlane.xlu0 %736
    %v738 = vmul.f32 %v737, %v733
    %v739 = vmul.f32 %v734, %v734
    %v740 = vsub.f32 %v738, %v739
    %v741 = vsub.f32 %v728, %v734
    %v742 = vadd.f32 %v740, 1e-05
    %v743 = vrsqrt.pop %v742
    %v744 = vmul.f32 %v741, %v743
    %v745 = vlaneseq
    %v746 = vshrl.u32 %v745, 7
    %v747 = vsub.s32 7, %v746
    %v748 = vrot.slane %v51, %v747
    %v749 = vmul.f32 %v744, %v748
    %v750 = vlaneseq
    %v751 = vshrl.u32 %v750, 7
    %v752 = vsub.s32 0, %v751
    %v753 = vrot.slane %v55, %v752
    %v754 = vadd.f32 %v749, %v753
    %v755 = vmul.f32 %v754, 0.2
    %v756 = vmax.f32 %v754, %v755
    %v757 = vld [vmem:[%s4] sm:$0xff]
    %v758 = vld [vmem:[%s4 + $0x8] sm:$0xff]
    %v759 = vld [vmem:[%s4 + $0x10] sm:$0xff]
    %v760 = vld [vmem:[%s4 + $0x18] sm:$0xff]
    %v761 = vld [vmem:[%s4 + $0x20] sm:$0xff]
    %v762 = vld [vmem:[%s4 + $0x28] sm:$0xff]
    %v763 = vld [vmem:[%s4 + $0x30] sm:$0xff]
    %v764 = vld [vmem:[%s4 + $0x38] sm:$0xff]
    %v765 = vld [vmem:[%s4 + $0x40] sm:$0xff]
    %v766 = vld [vmem:[%s4 + $0x48] sm:$0xff]
    %v767 = vld [vmem:[%s4 + $0x50] sm:$0xff]
    %v768 = vld [vmem:[%s4 + $0x58] sm:$0xff]
    %v769 = vld [vmem:[%s4 + $0x60] sm:$0xff]
    %v770 = vld [vmem:[%s4 + $0x68] sm:$0xff]
    %v771 = vld [vmem:[%s4 + $0x70] sm:$0xff]
    %v772 = vld [vmem:[%s4 + $0x78] sm:$0xff]
    %v773 = vlaneseq
    %v774 = vshrl.u32 %v773, 7
    %v775 = vsub.s32 1, %v774
    %v776 = vrot.slane %v55, %v775
    %777 = vmatprep.subr.mxu0 0.0
    %778 = vmatpush1.msra.mxu0 %v757
    %779 = vmatprep.subr.mxu0 0.0
    %780 = vmatpush1.msra.mxu0 %v758
    %781 = vmatprep.subr.mxu0 0.0
    %782 = vmatpush1.msra.mxu0 %v759
    %783 = vmatprep.subr.mxu0 0.0
    %784 = vmatpush1.msra.mxu0 %v760
    %785 = vmatprep.subr.mxu0 0.0
    %786 = vmatpush1.msra.mxu0 %v761
    %787 = vmatprep.subr.mxu0 0.0
    %788 = vmatpush1.msra.mxu0 %v762
    %789 = vmatprep.subr.mxu0 0.0
    %790 = vmatpush1.msra.mxu0 %v763
    %791 = vmatprep.subr.mxu0 0.0
    %792 = vmatpush1.msra.mxu0 %v764
    %793 = vmatprep.subr.mxu0 0.0
    %794 = vmatpush1.msra.mxu0 %v765
    %795 = vmatprep.subr.mxu0 0.0
    %796 = vmatpush1.msra.mxu0 %v766
    %797 = vmatprep.subr.mxu0 0.0
    %798 = vmatpush1.msra.mxu0 %v767
    %799 = vmatprep.subr.mxu0 0.0
    %800 = vmatpush1.msra.mxu0 %v768
    %801 = vmatprep.subr.mxu0 0.0
    %802 = vmatpush1.msra.mxu0 %v769
    %803 = vmatprep.subr.mxu0 0.0
    %804 = vmatpush1.msra.mxu0 %v770
    %805 = vmatprep.subr.mxu0 0.0
    %806 = vmatpush1.msra.mxu0 %v771
    %807 = vmatprep.subr.mxu0 0.0
    %808 = vmatpush1.msra.mxu0 %v772
    %809 = vmatprep.subr.mxu0 0.0
    %810 = vmatpush1.msra.mxu0 0.0
    %811 = vmatprep.subr.mxu0 0.0
    %812 = vmatpush1.msra.mxu0 0.0
    %813 = vmatprep.subr.mxu0 0.0
    %814 = vmatpush1.msra.mxu0 0.0
    %815 = vmatprep.subr.mxu0 0.0
    %816 = vmatpush1.msra.mxu0 0.0
    %817 = vmatprep.subr.mxu0 0.0
    %818 = vmatpush1.msra.mxu0 0.0
    %819 = vmatprep.subr.mxu0 0.0
    %820 = vmatpush1.msra.mxu0 0.0
    %821 = vmatprep.subr.mxu0 0.0
    %822 = vmatpush1.msra.mxu0 0.0
    %823 = vmatprep.subr.mxu0 0.0
    %824 = vmatpush1.msra.mxu0 0.0
    %825 = vmatprep.subr.mxu0 0.0
    %826 = vmatpush1.msra.mxu0 0.0
    %827 = vmatprep.subr.mxu0 0.0
    %828 = vmatpush1.msra.mxu0 0.0
    %829 = vmatprep.subr.mxu0 0.0
    %830 = vmatpush1.msra.mxu0 0.0
    %831 = vmatprep.subr.mxu0 0.0
    %832 = vmatpush1.msra.mxu0 0.0
    %833 = vmatprep.subr.mxu0 0.0
    %834 = vmatpush1.msra.mxu0 0.0
    %835 = vmatprep.subr.mxu0 0.0
    %836 = vmatpush1.msra.mxu0 0.0
    %837 = vmatprep.subr.mxu0 0.0
    %838 = vmatpush1.msra.mxu0 0.0
    %839 = vmatprep.subr.mxu0 0.0
    %840 = vmatpush1.msra.mxu0 0.0
    %841 = vmatprep.mubr.f32.mxu0 0.0
    %842 = vmatmul.mubr.f32.gmra.mrb[0].mxu0 %v756
    %v843 = vpop.f32.mrb[0].mxu0
    %v844 = vadd.f32 %v776, %v843
    %v845 = vpop.f32.mrb[0].mxu0
    %846 = vdwg.mxu0
    %vm847 = vcmask 261120
    %848 = vst.msk [vmem:[%s6] sm:$0xff] %vm847, %v844
    // Predicated region
    $region34: #{dance2style_forward.1} parent=1 // pred_check
      _
    $region35: #{dance2style_forward.1} parent=1 // pred_check_branch
      %850 = sbr.rel (0) target = $region37
    $region36: #{dance2style_forward.1} parent=1 // pred_region
      _
    $region37: #{dance2style_forward.1} parent=1 // pred_fallthru
      _
    // Predicated region
    $region38: #{dance2style_forward.1} parent=1 // pred_check
      _
    $region39: #{dance2style_forward.1} parent=1 // pred_check_branch
      %852 = sbr.rel (0) target = $region41
    $region40: #{dance2style_forward.1} parent=1 // pred_region
      _
    $region41: #{dance2style_forward.1} parent=1 // pred_fallthru
      _
    %853 = vsyncpa [#allocation3], 1
    %854 = vsyncpa [#allocation5], 1

</llo_original>
